<compile_context>
chip_gen: v7x
topology: tpu7x:2x2x1
jax: 0.10.0
libtpu: 0.0.40
codegen_flags: <defaults>
</compile_context>

<pallas_src>
import functools

import jax
import jax.numpy as jnp
import numpy as np
from jax.experimental import pallas as pl
from jax.experimental.pallas import tpu as pltpu


# ---------------------------------------------------------------------------
# Kernels
# ---------------------------------------------------------------------------
def _addcoords_dma_kernel(bt, col_slices, x_hbm, coords_ref, out_hbm,
                          coords_vmem, sems):
    """grid = (num_batch_chunks,).  Pure DMA kernel.

    x_hbm:       (B, C*H*W)            raw HBM ref (memory_space=pl.ANY)
    coords_ref:  (1, extra*H*W)        VMEM block, constant index -> DMA'd once
    out_hbm:     (B, (C+extra)*H*W)    raw HBM ref
    coords_vmem: (bt, extra*H*W)       VMEM scratch (batch-broadcast coords)
    sems:        (len(col_slices)+1,)  DMA semaphores, one per in-flight copy
    """
    b = pl.program_id(0)
    B, n_in = x_hbm.shape
    n_co = coords_vmem.shape[1]
    # Clamp the chunk start so a partial last chunk re-covers rows of the
    # previous chunk; overlapping writes carry identical data (copy is
    # idempotent), so this is safe even with chunks in flight concurrently.
    start = jnp.minimum(b * bt, B - bt)

    # Refill the broadcast coordinate tile every step (cheap VMEM stores).
    # Keeping each grid step self-contained makes "parallel" megacore
    # splitting on v7x safe (no cross-step scratch/semaphore dependencies).
    coords_vmem[...] = jnp.broadcast_to(coords_ref[...], (bt, n_co))

    # Issue all copies up front (multiple concurrent DMA streams), then wait.
    copies = []
    for i, (c0, cw) in enumerate(col_slices):
        cp = pltpu.make_async_copy(
            x_hbm.at[pl.ds(start, bt), pl.ds(c0, cw)],
            out_hbm.at[pl.ds(start, bt), pl.ds(c0, cw)],
            sems.at[i])
        cp.start()
        copies.append(cp)
    coord_cp = pltpu.make_async_copy(
        coords_vmem,
        out_hbm.at[pl.ds(start, bt), pl.ds(n_in, n_co)],
        sems.at[len(col_slices)])
    coord_cp.start()
    for cp in copies:
        cp.wait()
    coord_cp.wait()


def _addcoords_dma_hbm_coords_kernel(bt, col_slices, x_hbm, coords_hbm,
                                     out_hbm, sems):
    """Fallback for very large coordinate rows: coords are pre-broadcast to
    (B, extra*H*W) in HBM by the wrapper and copied HBM->HBM (no VMEM at all)."""
    b = pl.program_id(0)
    B, n_in = x_hbm.shape
    n_co = coords_hbm.shape[1]
    start = jnp.minimum(b * bt, B - bt)

    copies = []
    for i, (c0, cw) in enumerate(col_slices):
        cp = pltpu.make_async_copy(
            x_hbm.at[pl.ds(start, bt), pl.ds(c0, cw)],
            out_hbm.at[pl.ds(start, bt), pl.ds(c0, cw)],
            sems.at[i])
        cp.start()
        copies.append(cp)
    coord_cp = pltpu.make_async_copy(
        coords_hbm.at[pl.ds(start, bt), :],
        out_hbm.at[pl.ds(start, bt), pl.ds(n_in, n_co)],
        sems.at[len(col_slices)])
    coord_cp.start()
    for cp in copies:
        cp.wait()
    coord_cp.wait()


# ---------------------------------------------------------------------------
# Wrapper helpers
# ---------------------------------------------------------------------------
def _coord_channels(H, W, dtype, with_r):
    """(1, extra*H*W) coordinate channels, computed once outside the kernel.

    Math in f32 (v5e VPU/EUP have no bf16 datapath), single cast at the end.
    Formulation mirrors the PyTorch module op-for-op (square H == W)."""
    xx = jax.lax.broadcasted_iota(jnp.float32, (H, W), 1) / (H - 1) * 2.0 - 1.0
    yy = jax.lax.broadcasted_iota(jnp.float32, (H, W), 0) / (W - 1) * 2.0 - 1.0
    chans = [xx, yy]
    if with_r:
        chans.append(jnp.sqrt((xx - 0.5) ** 2 + (yy - 0.5) ** 2))
    coords = jnp.stack(chans, axis=0).astype(dtype)
    return coords.reshape(1, len(chans) * H * W)


def _column_slices(n_in, bt, itemsize, max_slices=4, min_bytes=2 * 1024 * 1024):
    """Split the pass-through columns into up to `max_slices` contiguous ranges
    (each >= ~2 MiB per chunk) so several DMAs can be in flight per step."""
    if n_in <= 0:
        return ()
    chunk_bytes = bt * n_in * itemsize
    ns = int(max(1, min(max_slices, chunk_bytes // min_bytes, n_in)))
    base, rem = divmod(n_in, ns)
    slices, c0 = [], 0
    for i in range(ns):
        cw = base + (1 if i < rem else 0)
        slices.append((c0, cw))
        c0 += cw
    return tuple(slices)


def _round_up(n, m):
    return (n + m - 1) // m * m


def _vmem_capacity_bytes():
    # Generation-aware budget (64 MiB on v7x, 128 MiB on v5e/v6e).
    try:
        return int(pltpu.get_tpu_info().vmem_capacity_bytes)
    except Exception:
        return 64 * 1024 * 1024   # conservative default (v7x per-core VMEM)


# ---------------------------------------------------------------------------
# Public entry point
# ---------------------------------------------------------------------------
def add_coords(x, with_r=False, *, batch_chunk=None,
               max_vmem_coords_bytes=512 * 1024,
               coord_scratch_budget_bytes=4 * 1024 * 1024):
    """Pallas implementation of AddCoords.forward.  x: (B, C, H, W) NCHW."""
    B, C, H, W = x.shape
    if H != W:
        # The PyTorch module's concat only works for square maps.
        raise ValueError(f"AddCoords requires square spatial maps; got H={H}, W={W}.")
    if H < 2:
        raise ValueError("AddCoords needs spatial size >= 2 (divides by H-1 / W-1).")

    extra = 3 if with_r else 2
    hw = H * W
    n_in = C * hw
    n_co = extra * hw
    n_out = n_in + n_co
    itemsize = jnp.dtype(x.dtype).itemsize
    coords_bytes = n_co * itemsize

    coords = _coord_channels(H, W, x.dtype, with_r)   # (1, extra*hw)
    x2 = x.reshape(B, n_in)                           # free: contiguous NCHW

    use_vmem_coords = coords_bytes <= max_vmem_coords_bytes

    # Batch chunk: as large as possible (only the coords-broadcast VMEM scratch
    # bounds it on the primary path; the fallback uses the whole batch).
    if use_vmem_coords:
        bt = int(min(B, max(8, coord_scratch_budget_bytes // max(1, coords_bytes))))
    else:
        bt = B
    if batch_chunk is not None:                       # test/override hook
        bt = int(batch_chunk)
    bt = max(1, min(bt, B))
    nb = pl.cdiv(B, bt)

    col_slices = _column_slices(n_in, bt, itemsize)
    n_sems = len(col_slices) + 1

    if use_vmem_coords:
        # VMEM footprint: coords block (1, n_co) pads to 8 sublanes (possibly
        # double-buffered) + the (bt, n_co) broadcast scratch.  Cap at half of
        # this generation's physical VMEM.
        lane_pad = _round_up(max(n_co, 128), 128)
        need = (2 * 8 * lane_pad + _round_up(bt, 8) * lane_pad) * itemsize
        vmem_limit = int(min(max(2 * need, 4 * 1024 * 1024),
                             _vmem_capacity_bytes() // 2))
        kernel = functools.partial(_addcoords_dma_kernel, bt, col_slices)
        out2 = pl.pallas_call(
            kernel,
            out_shape=jax.ShapeDtypeStruct((B, n_out), x.dtype),
            grid_spec=pltpu.PrefetchScalarGridSpec(
                num_scalar_prefetch=0,
                grid=(nb,),
                in_specs=[pl.BlockSpec(memory_space=pl.ANY),        # x2 (HBM)
                          pl.BlockSpec((1, n_co), lambda b: (0, 0))],  # coords
                out_specs=pl.BlockSpec(memory_space=pl.ANY),         # out (HBM)
                scratch_shapes=[pltpu.VMEM((bt, n_co), x.dtype),
                                pltpu.SemaphoreType.DMA((n_sems,))]),
            compiler_params=pltpu.CompilerParams(
                dimension_semantics=("parallel",),
                vmem_limit_bytes=vmem_limit),
        )(x2, coords)
    else:
        # Rare path (huge spatial maps): pre-broadcast coords in HBM; kernel is
        # pure HBM->HBM DMA with essentially zero VMEM use.
        coords_b = jnp.broadcast_to(coords, (B, n_co))
        kernel = functools.partial(_addcoords_dma_hbm_coords_kernel, bt, col_slices)
        out2 = pl.pallas_call(
            kernel,
            out_shape=jax.ShapeDtypeStruct((B, n_out), x.dtype),
            grid_spec=pltpu.PrefetchScalarGridSpec(
                num_scalar_prefetch=0,
                grid=(nb,),
                in_specs=[pl.BlockSpec(memory_space=pl.ANY),
                          pl.BlockSpec(memory_space=pl.ANY)],
                out_specs=pl.BlockSpec(memory_space=pl.ANY),
                scratch_shapes=[pltpu.SemaphoreType.DMA((n_sems,))]),
            compiler_params=pltpu.CompilerParams(
                dimension_semantics=("parallel",)),
        )(x2, coords_b)

    return out2.reshape(B, C + extra, H, W)


# ---------------------------------------------------------------------------
# Pure-JAX reference (mirrors the PyTorch semantics, square H == W)
# ---------------------------------------------------------------------------
def _reference_add_coords(x, with_r=False):
    B, C, H, W = x.shape
    xx = jnp.broadcast_to(
        jnp.arange(W, dtype=jnp.float32) / (H - 1) * 2.0 - 1.0, (H, W))
    yy = jnp.broadcast_to(
        (jnp.arange(H, dtype=jnp.float32) / (W - 1) * 2.0 - 1.0)[:, None], (H, W))
    xx_b = jnp.broadcast_to(xx[None, None], (B, 1, H, W)).astype(x.dtype)
    yy_b = jnp.broadcast_to(yy[None, None], (B, 1, H, W)).astype(x.dtype)
    parts = [x, xx_b, yy_b]
    if with_r:
        rr = jnp.sqrt((xx_b - 0.5) ** 2 + (yy_b - 0.5) ** 2)
        parts.append(rr.astype(x.dtype))
    return jnp.concatenate(parts, axis=1)


if __name__ == "__main__":
    key = jax.random.PRNGKey(0)
    k0, k1 = jax.random.split(key)
    B, C, H, W = 2, 4, 16, 16
    x = jax.random.normal(k0, (B, C, H, W), dtype=jnp.float32)

    # Primary path (coords staged in VMEM, pass-through via HBM->HBM DMA).
    out = jax.block_until_ready(add_coords(x, with_r=False))
    ref = _reference_add_coords(x, with_r=False)
    assert out.shape == (B, C + 2, H, W), out.shape
    np.testing.assert_allclose(np.asarray(out), np.asarray(ref), rtol=1e-6, atol=1e-6)

    out_r = jax.block_until_ready(add_coords(x, with_r=True))
    ref_r = _reference_add_coords(x, with_r=True)
    assert out_r.shape == (B, C + 3, H, W), out_r.shape
    np.testing.assert_allclose(np.asarray(out_r), np.asarray(ref_r), rtol=1e-6, atol=1e-6)

    # Multi-chunk grid with a partial (clamped / overlapping) last chunk.
    x5 = jax.random.normal(k1, (5, C, H, W), dtype=jnp.float32)
    out5 = jax.block_until_ready(add_coords(x5, with_r=True, batch_chunk=2))
    ref5 = _reference_add_coords(x5, with_r=True)
    np.testing.assert_allclose(np.asarray(out5), np.asarray(ref5), rtol=1e-6, atol=1e-6)

    # Fallback path (coords pre-broadcast in HBM), forced for test coverage.
    out_f = jax.block_until_ready(add_coords(x, with_r=False, max_vmem_coords_bytes=0))
    np.testing.assert_allclose(np.asarray(out_f), np.asarray(ref), rtol=1e-6, atol=1e-6)

    print("KERNEL_OK")
</pallas_src>

<mosaic_0001>
module attributes {stable_mosaic.version = 11 : i64} {
  func.func @_addcoords_dma_kernel(%arg0: i32, %arg1: memref<2x1024xf32, #tpu.memory_space<any>>, %arg2: memref<1x512xf32, #tpu.memory_space<vmem>>, %arg3: memref<2x1536xf32, #tpu.memory_space<any>>, %arg4: memref<2x512xf32, #tpu.memory_space<vmem>>, %arg5: memref<2x!tpu.dma_semaphore, #tpu.memory_space<semaphore_mem>>) attributes {dimension_semantics = [#tpu.dimension_semantics<parallel>], iteration_bounds = array<i64: 1>, scalar_prefetch = 0 : i64, scratch_operands = 2 : i64, tpu.core_type = #tpu.core_type<tc>, window_params = [{}, {pipeline_mode = #tpu.pipeline_mode<synchronous>, transform_indices = @transform_1, window_bounds = array<i64: 1, 512>}, {}]} {
    %c2_i32 = arith.constant 2 : i32
    %0 = arith.muli %arg0, %c2_i32 : i32
    %c0_i32 = arith.constant 0 : i32
    %1 = arith.minsi %0, %c0_i32 : i32
    %c0 = arith.constant 0 : index
    %c0_0 = arith.constant 0 : index
    %2 = vector.load %arg2[%c0, %c0_0] : memref<1x512xf32, #tpu.memory_space<vmem>>, vector<1x512xf32>
    %3 = vector.shape_cast %2 : vector<1x512xf32> to vector<1x512xf32>
    %4 = vector.broadcast %3 : vector<1x512xf32> to vector<2x512xf32>
    %c0_1 = arith.constant 0 : index
    %c0_2 = arith.constant 0 : index
    %5 = vector.load %arg4[%c0_1, %c0_2] : memref<2x512xf32, #tpu.memory_space<vmem>>, vector<2x512xf32>
    tpu.vector_store %arg4[%c0_1, %c0_2], %4 {strides = array<i32>} : memref<2x512xf32, #tpu.memory_space<vmem>>, vector<2x512xf32>,
    %c0_i32_3 = arith.constant 0 : i32
    %c0_i32_4 = arith.constant 0 : i32
    %6 = tpu.memref_slice %arg1[%1, %c0_i32_4] : memref<2x1024xf32, #tpu.memory_space<any>> -> memref<2x1024xf32, #tpu.memory_space<any>>
    %c0_i32_5 = arith.constant 0 : i32
    %7 = tpu.memref_slice %arg3[%1, %c0_i32_5] : memref<2x1536xf32, #tpu.memory_space<any>> -> memref<2x1024xf32, #tpu.memory_space<any>>
    %8 = tpu.memref_slice %arg5[%c0_i32_3] : memref<2x!tpu.dma_semaphore, #tpu.memory_space<semaphore_mem>> -> memref<1x!tpu.dma_semaphore, #tpu.memory_space<semaphore_mem>>
    %9 = tpu.memref_squeeze %8 : memref<1x!tpu.dma_semaphore, #tpu.memory_space<semaphore_mem>> -> memref<!tpu.dma_semaphore, #tpu.memory_space<semaphore_mem>>
    tpu.enqueue_dma source(%6 : memref<2x1024xf32, #tpu.memory_space<any>>) target(%7 : memref<2x1024xf32, #tpu.memory_space<any>>) target_semaphore(%9 : memref<!tpu.dma_semaphore, #tpu.memory_space<semaphore_mem>>)
    %c1_i32 = arith.constant 1 : i32
    %c1024_i32 = arith.constant 1024 : i32
    %10 = tpu.memref_slice %arg3[%1, %c1024_i32] : memref<2x1536xf32, #tpu.memory_space<any>> -> memref<2x512xf32, #tpu.memory_space<any>>
    %11 = tpu.memref_slice %arg5[%c1_i32] : memref<2x!tpu.dma_semaphore, #tpu.memory_space<semaphore_mem>> -> memref<1x!tpu.dma_semaphore, #tpu.memory_space<semaphore_mem>>
    %12 = tpu.memref_squeeze %11 : memref<1x!tpu.dma_semaphore, #tpu.memory_space<semaphore_mem>> -> memref<!tpu.dma_semaphore, #tpu.memory_space<semaphore_mem>>
    tpu.enqueue_dma source(%arg4 : memref<2x512xf32, #tpu.memory_space<vmem>>) target(%10 : memref<2x512xf32, #tpu.memory_space<any>>) target_semaphore(%12 : memref<!tpu.dma_semaphore, #tpu.memory_space<semaphore_mem>>)
    %c0_i32_6 = arith.constant 0 : i32
    %c0_i32_7 = arith.constant 0 : i32
    %13 = tpu.memref_slice %arg1[%1, %c0_i32_7] : memref<2x1024xf32, #tpu.memory_space<any>> -> memref<2x1024xf32, #tpu.memory_space<any>>
    %c0_i32_8 = arith.constant 0 : i32
    %14 = tpu.memref_slice %arg3[%1, %c0_i32_8] : memref<2x1536xf32, #tpu.memory_space<any>> -> memref<2x1024xf32, #tpu.memory_space<any>>
    %15 = tpu.memref_slice %arg5[%c0_i32_6] : memref<2x!tpu.dma_semaphore, #tpu.memory_space<semaphore_mem>> -> memref<1x!tpu.dma_semaphore, #tpu.memory_space<semaphore_mem>>
    %16 = tpu.memref_squeeze %15 : memref<1x!tpu.dma_semaphore, #tpu.memory_space<semaphore_mem>> -> memref<!tpu.dma_semaphore, #tpu.memory_space<semaphore_mem>>
    tpu.wait_dma2 semaphore(%16 : memref<!tpu.dma_semaphore, #tpu.memory_space<semaphore_mem>>) src(%13 : memref<2x1024xf32, #tpu.memory_space<any>>) dst(%14 : memref<2x1024xf32, #tpu.memory_space<any>>)
    %c1_i32_9 = arith.constant 1 : i32
    %c1024_i32_10 = arith.constant 1024 : i32
    %17 = tpu.memref_slice %arg3[%1, %c1024_i32_10] : memref<2x1536xf32, #tpu.memory_space<any>> -> memref<2x512xf32, #tpu.memory_space<any>>
    %18 = tpu.memref_slice %arg5[%c1_i32_9] : memref<2x!tpu.dma_semaphore, #tpu.memory_space<semaphore_mem>> -> memref<1x!tpu.dma_semaphore, #tpu.memory_space<semaphore_mem>>
    %19 = tpu.memref_squeeze %18 : memref<1x!tpu.dma_semaphore, #tpu.memory_space<semaphore_mem>> -> memref<!tpu.dma_semaphore, #tpu.memory_space<semaphore_mem>>
    tpu.wait_dma2 semaphore(%19 : memref<!tpu.dma_semaphore, #tpu.memory_space<semaphore_mem>>) src(%arg4 : memref<2x512xf32, #tpu.memory_space<vmem>>) dst(%17 : memref<2x512xf32, #tpu.memory_space<any>>)
    return
  }
  func.func @transform_1(%arg0: i32) -> (i32, i32) {
    %c0_i32 = arith.constant 0 : i32
    %c0_i32_0 = arith.constant 0 : i32
    %c0_i32_1 = arith.constant 0 : i32
    return %c0_i32, %c0_i32_0 : i32, i32
  }
}

</mosaic_0001>

<llo_original>
// kernel: tpu_custom_call.1
$region0: #{tpu_custom_call.1}
  #allocation0 [shape = 'u32[]', space=smem, size = 0x4, offset = 0x4, fixed_abs, tag = 'smem constant byte address 0x4 - core index']
  #allocation1 [shape = 'u32[144,128]{1,0:T(1,128)}', space=vmem, size = 0x12000, scoped, tag = 'internal scratch']
  #allocation2 [shape = 'f32[2,512]{1,0:T(2,128)}', space=vmem, size = 0x1000, scoped, tag = 'scratch operand']
  #allocation3 [shape = 's32[2]{0}', space=sflag, size = 0x8, scoped, tag = 'scratch operand']
  #allocation6 [shape = 's32[]', space=sflag, size = 0x4, offset = 0, fixed_abs, tag = 'sflag constant byte address 0x0 - dummy sync flag']
  #allocation7 [shape = 'u32[0]{0}', space=smem, size = 0, offset = 0, fixed_abs, tag = 'smem constant byte address 0x0 - null']
  #allocation8 [shape = 's32[]', space=sflag, size = 0x4, offset = 0, fixed_abs, tag = 'sflag constant byte address 0x0 - dummy sync flag']
  #allocation9 [shape = 's32[]', space=sflag, size = 0x4, offset = 0, fixed_abs, tag = 'sflag constant byte address 0x0 - dummy sync flag']
  #allocation10 [shape = 'u32[]', space=smem, size = 0x4, offset = 0x44, fixed_abs, tag = 'smem constant byte address 0x44 - assertion arg 0']
  #allocation11 [shape = 'u32[]', space=smem, size = 0x4, offset = 0x48, fixed_abs, tag = 'smem constant byte address 0x48 - assertion arg 1']
  %s0 = inlined_call_operand.hbm [shape: f32[2,1024], index: 0, kind: input, shape index: {}]
  %s1 = inlined_call_operand.hbm [shape: f32[1,512], index: 1, kind: input, shape index: {}]
  %s2 = inlined_call_operand.hbm [shape: f32[2,1536], index: 2, kind: output, shape index: {}]
  %s3 = sld [smem:[#allocation0]]
  $region14: #{tpu_custom_call.1} parent=0
    _
  %s5 = ssub.s32 1, %s3
  %s6 = scalar_select 0, %s5, %s3
  $region1: #{tpu_custom_call.1} parent=0
    #allocation4 [shape = 'u8[2048]{0}', space=vmem, size = 0x800, scoped, tag = 'input window, operand 1, single buffered']
    #allocation5 [shape = 's32[1]{0}', space=sflag, size = 0x4, scoped, tag = 'scoped memory for tpu_custom_call.1']
    %7 = vsyncpa [#allocation5], 0
    // Predicated region
    $region2: #{tpu_custom_call.1} parent=1 // pred_check
      _
    $region3: #{tpu_custom_call.1} parent=1 // pred_check_branch
      %9 = sbr.rel (0) target = $region5
    $region4: #{tpu_custom_call.1} parent=1 // pred_region
      %s11 = ssub.s32 64, 64
      %12 = vsyncadd [#allocation5], %s11
      %s14 = sshll.u32 [#allocation4], 4
      %s15 = int_to_ptr.vmem [resolvable:$true] %s14
      %17 = dma.hbm_to_vmem [thread:$0]  %s1, 64, %s15, [#allocation5]
    $region5: #{tpu_custom_call.1} parent=1 // pred_fallthru
      _
    // Predicated region
    $region6: #{tpu_custom_call.1} parent=1 // pred_check
      _
    $region7: #{tpu_custom_call.1} parent=1 // pred_check_branch
      %19 = sbr.rel (0) target = $region9
    $region8: #{tpu_custom_call.1} parent=1 // pred_region
      %20 = dma.done [#allocation5], 64
    $region9: #{tpu_custom_call.1} parent=1 // pred_fallthru
      _
    %s21 = smul.u32 0, 2
    %p22 = scmp.lt.s32.totalorder %s21, 0
    %s23 = scalar_select %p22, %s21, 0
    %v24 = vld [vmem:[#allocation4] sm:$0xf]
    %v26 = vlaneseq
    %v27 = vshrl.u32 %v26, 7
    %v28 = vsub.s32 0, %v27
    %v29 = vrot.slane %v24, %v28
    %v30 = vlaneseq
    %v31 = vshrl.u32 %v30, 7
    %v32 = vsub.s32 1, %v31
    %v33 = vrot.slane %v24, %v32
    %v34 = vlaneseq
    %v35 = vshrl.u32 %v34, 7
    %v36 = vsub.s32 2, %v35
    %v37 = vrot.slane %v24, %v36
    %v38 = vlaneseq
    %v39 = vshrl.u32 %v38, 7
    %v40 = vsub.s32 3, %v39
    %v41 = vrot.slane %v24, %v40
    %v42 = vcombine.low %v29, %v33
    %v43 = vcombine.low %v37, %v41
    %v45 = vunpack.c.l.s4 1983009808
    %v46 = vunpack.c.0.s8 %v45
    %v47 = vlaneseq
    %v48 = vshrl.u32 %v47, 7
    %v49 = vsub.s32 %v46, %v48
    %v50 = vrot.slane %v42, %v49
    %v52 = vunpack.c.l.s4 1983009808
    %v53 = vunpack.c.0.s8 %v52
    %v54 = vlaneseq
    %v55 = vshrl.u32 %v54, 7
    %v56 = vsub.s32 %v53, %v55
    %v57 = vrot.slane %v43, %v56
    %v58 = vcombine.low %v50, %v57
    %60 = vst [vmem:[#allocation2] sm:$0xff] %v58
    %s61 = sshra.s32 %s23, 1
    %s62 = sand.u32 %s23, 1
    %s63 = smul.u32 %s61, 8
    %s64 = smul.addr %s63, 32
    %s65 = scalar_lea.hbm %s0, %s64
    %s66 = smul.u32 %s61, 12
    %s67 = smul.addr %s66, 32
    %s68 = scalar_lea.hbm %s2, %s67
    %s70 = sshll.u32 1, 14
    %s71 = sxor.u32 4294967295, %s70
    %s74 = sshll.u32 3, 24
    %s75 = sxor.u32 4294967295, %s74
    %s76 = sand.u32 0, %s75
    %s78 = sor.u32 %s76, 0
    %81 = dma.general %s65, 256, %s68, [#allocation3], [#allocation6], [#allocation7], %s78, 0
    %s82 = sadd.s32 8, %s66
    %s83 = smul.addr %s82, 32
    %s84 = scalar_lea.hbm %s2, %s83
    %s85 = scalar_lea.sflag [#allocation3], 1
    // Predicated region
    $region10: #{tpu_custom_call.1} parent=1 // pred_check
      _
    $region11: #{tpu_custom_call.1} parent=1 // pred_check_branch
      %87 = sbr.rel target = $region13
    $region12: #{tpu_custom_call.1} parent=1 // pred_region
      %88 = sst [smem:[#allocation10]] [#allocation9]
      %89 = sst [smem:[#allocation11]] [#allocation8]
    $region13: #{tpu_custom_call.1} parent=1 // pred_fallthru
      _
    %91 = shalt.err (0)
    %s93 = sshll.u32 [#allocation2], 4
    %s94 = int_to_ptr.vmem [resolvable:$true] %s93
    %96 = dma.vmem_to_hbm [thread:$0]  %s94, 128, %s84, %s85
    %s97 = smul.u32 2, 1
    %s98 = smul.u32 %s97, 8
    %s99 = sshll.u32 %s98, 4
    %100 = dma.done [#allocation3], %s99
    %s101 = smul.u32 %s97, 4
    %s102 = sshll.u32 %s101, 4
    %103 = dma.done %s85, %s102
    %104 = vsyncpa [#allocation5], 1
  %105 = vsyncmov [#allocation3]
  %s106 = vpop.sfrf %105
  %p107 = scmp.eq.s32.totalorder %s106, 0
  %p108 = pneg %p107
  %110 = shalt.err (%p108)
  %s111 = scalar_lea.sflag [#allocation3], 1
  %112 = vsyncmov %s111
  %s113 = vpop.sfrf %112
  %p114 = scmp.eq.s32.totalorder %s113, 0
  %p115 = pneg %p114
  %117 = shalt.err (%p115)

</llo_original>
